<compile_context>
chip_gen: v7x
topology: tpu7x:2x2x1
jax: 0.10.0
libtpu: 0.0.40
codegen_flags: <defaults>
</compile_context>

<pallas_src>
import jax
import jax.numpy as jnp
from jax.experimental import pallas as pl
from jax.experimental.pallas import tpu as pltpu


def _round_up(x, m):
    return ((x + m - 1) // m) * m


def _cdiv(a, b):
    return (a + b - 1) // b


def _vmem_capacity_bytes():
    try:
        return int(pltpu.get_tpu_info().vmem_capacity_bytes)
    except Exception:
        return 64 * 1024 * 1024  # conservative fallback (v7x per-TC VMEM)


def _choose_tiling(B, D, H, stream_item, budget_bytes):
    """Pick (tb, num_b, tk, num_k).

    tb: batch tile (rows of x per grid step); tk: contraction tile over D.
    Prefers w1 fully resident (num_k == 1); only tiles D when the weights plus
    a reasonable x tile cannot fit the VMEM budget.  Accounting honours the
    (8, 128) physical tile padding and the 2x double-buffering of every input.
    """
    H_l = _round_up(H, 128)

    def vmem_bytes(tb, tk):
        tb8 = _round_up(tb, 8)
        x_blk = 2 * tb8 * _round_up(tk, 128) * stream_item      # x, double buffered
        w1_blk = 2 * _round_up(tk, 8) * H_l * stream_item       # w1, double buffered
        out_blk = 2 * 8 * _round_up(tb, 128) * 4                # (1, tb) f32 out, x2
        acc = tb8 * H_l * 4                                     # f32 accumulator scratch
        small = 2 * 2 * 8 * H_l * 4                             # b1 + w2 rows (f32), x2
        return x_blk + w1_blk + out_blk + acc + small + (1 << 20)

    # --- batch tiling -------------------------------------------------------
    # Big tiles for DMA efficiency, but >=2 tiles once the batch is big enough
    # (v7x megacore / pipeline overlap) and balanced so padding waste in the
    # partial last tile stays small.
    if B <= 128:
        tb_cands = [B]                      # single tile; block dims == array dims
    else:
        n = max(_cdiv(B, 1024), 2)
        tb_bal = _round_up(_cdiv(B, n), 128)
        tb_cands = sorted({t for t in (tb_bal, 512, 256, 128) if t <= tb_bal},
                          reverse=True)

    # --- contraction (D) tiling ---------------------------------------------
    # Halve tk (staying a 128-aligned exact divisor of D) only if the resident
    # w1 block does not fit.
    for tb in tb_cands:
        tk = D
        while True:
            if vmem_bytes(tb, tk) <= budget_bytes:
                return tb, _cdiv(B, tb), tk, _cdiv(D, tk)
            if tk % 256 == 0:
                tk //= 2
            else:
                break

    # Fallback: smallest batch tile + smallest legal contraction tile.
    # TODO(synk): tile H as well if hidden_dim ever grows enough to overflow.
    tb = tb_cands[-1]
    tk = D
    while tk % 256 == 0 and vmem_bytes(tb, tk) > budget_bytes:
        tk //= 2
    return tb, _cdiv(B, tb), tk, _cdiv(D, tk)


def _probe_kernel(x_ref, w1_ref, b1_ref, w2_ref, b2_ref, o_ref, acc_ref):
    k = pl.program_id(1)

    @pl.when(k == 0)
    def _():
        acc_ref[...] = jnp.zeros_like(acc_ref)

    # fc1 partial product: MXU matmul with f32 accumulate into VMEM scratch.
    acc_ref[...] += jnp.dot(x_ref[...], w1_ref[...],
                            preferred_element_type=jnp.float32)

    @pl.when(k == pl.num_programs(1) - 1)
    def _():
        # Epilogue in f32: bias add + ReLU on the VPU.
        h = jnp.maximum(acc_ref[...] + b1_ref[...], 0.0)          # (TB, H) f32
        # fc2: contract H between the (1, H) weight row and the (TB, H)
        # activations.  RHS-transposed contraction produces the result
        # lane-major as (1, TB) -> lane-dense full-vreg output store.
        # Cast h to the streaming dtype so both matmuls use the same MXU mode.
        logit = jax.lax.dot_general(
            w2_ref[...], h.astype(w2_ref.dtype),
            dimension_numbers=(((1,), (1,)), ((), ())),
            preferred_element_type=jnp.float32)                   # (1, TB)
        logit = logit + b2_ref[0]                                 # scalar from SMEM
        o_ref[...] = jax.nn.sigmoid(logit).astype(o_ref.dtype)


def semantic_entropy_prob_target(x, w1, b1, w2, b2, *,
                                 stream_dtype=jnp.bfloat16):
    """x: (B, D); w1: (D, H); b1: (H,); w2: (H, 1); b2: (1,) -> (B,) f32.

    stream_dtype: dtype used to stream x / w1 / w2 through HBM->VMEM (bf16 by
    default, halving the dominant HBM traffic); matmuls accumulate in f32 and
    the epilogue is f32, so use stream_dtype=jnp.float32 for exact f32 parity.
    """
    B, D = x.shape
    H = w1.shape[1]

    # VMEM budget: most of the physical per-core capacity minus headroom
    # (~56 MiB on v7x, ~112 MiB on v5e/v6e).
    vmem_cap = _vmem_capacity_bytes()
    vmem_limit = int(vmem_cap - max(8 << 20, vmem_cap // 8))

    stream_item = jnp.dtype(stream_dtype).itemsize
    tb, num_b, tk, num_k = _choose_tiling(B, D, H, stream_item, vmem_limit)

    # Cast only when needed (no-op if the caller already produces stream_dtype).
    x_s = x if x.dtype == stream_dtype else x.astype(stream_dtype)
    w1_s = w1 if w1.dtype == stream_dtype else w1.astype(stream_dtype)
    w2_row = w2.reshape(1, H).astype(stream_dtype)
    b1_2d = b1.reshape(1, H).astype(jnp.float32)
    b2_1d = b2.reshape(1).astype(jnp.float32)

    w1_bytes = D * H * stream_item
    out = pl.pallas_call(
        _probe_kernel,
        out_shape=jax.ShapeDtypeStruct((1, B), jnp.float32),
        grid=(num_b, num_k),
        in_specs=[
            pl.BlockSpec((tb, tk), lambda i, k: (i, k)),            # x: streamed
            pl.BlockSpec((tk, H), lambda i, k: (k, 0)),             # w1 (resident if num_k==1)
            pl.BlockSpec((1, H), lambda i, k: (0, 0)),              # b1 (f32)
            pl.BlockSpec((1, H), lambda i, k: (0, 0)),              # w2 row
            pl.BlockSpec(memory_space=pltpu.MemorySpace.SMEM),      # b2 scalar
        ],
        out_specs=pl.BlockSpec((1, tb), lambda i, k: (0, i)),       # lane-dense output
        scratch_shapes=[pltpu.VMEM((tb, H), jnp.float32)],          # fc1 accumulator
        compiler_params=pltpu.CompilerParams(
            dimension_semantics=("parallel", "arbitrary"),
            vmem_limit_bytes=vmem_limit,
        ),
        cost_estimate=pl.CostEstimate(
            flops=2 * B * D * H + 2 * B * H,
            transcendentals=2 * B,     # sigmoid ~ exp + reciprocal per element
            bytes_accessed=(B * D * stream_item
                            + (w1_bytes if num_k == 1 else num_b * w1_bytes)
                            + 4 * (2 * H + 1 + B)),
        ),
    )(x_s, w1_s, b1_2d, w2_row, b2_1d)

    return out[0]   # (B,) == squeeze(-1)


def _reference(x, w1, b1, w2, b2):
    h = jnp.maximum(x @ w1 + b1, 0.0)
    return jax.nn.sigmoid(h @ w2 + b2)[:, 0]


if __name__ == "__main__":
    # Small shapes consistent with the module's forward: (batch, input_dim).
    B, D, H = 8, 32, 64
    key = jax.random.PRNGKey(0)
    kx, kw1, kb1, kw2, kb2 = jax.random.split(key, 5)

    x = jax.random.normal(kx, (B, D), dtype=jnp.float32)
    # Deterministic parameter init (Linear-like scale), stored pre-transposed.
    w1 = jax.random.normal(kw1, (D, H), dtype=jnp.float32) * (1.0 / D ** 0.5)
    b1 = jax.random.normal(kb1, (H,), dtype=jnp.float32) * 0.01
    w2 = jax.random.normal(kw2, (H, 1), dtype=jnp.float32) * (1.0 / H ** 0.5)
    b2 = jax.random.normal(kb2, (1,), dtype=jnp.float32) * 0.01

    ref = _reference(x, w1, b1, w2, b2)

    # Exact-parity path (f32 end-to-end).
    out_f32 = semantic_entropy_prob_target(x, w1, b1, w2, b2,
                                           stream_dtype=jnp.float32)
    jax.block_until_ready(out_f32)
    assert out_f32.shape == (B,), out_f32.shape
    assert jnp.allclose(out_f32, ref, atol=1e-5, rtol=1e-5), (out_f32, ref)

    # Default fast path: bf16-streamed x/w1/w2, f32 accumulate + f32 epilogue.
    out_bf16 = semantic_entropy_prob_target(x, w1, b1, w2, b2)
    jax.block_until_ready(out_bf16)
    assert out_bf16.shape == (B,), out_bf16.shape
    assert jnp.allclose(out_bf16, ref, atol=2e-2, rtol=0.0), (out_bf16, ref)

    print("KERNEL_OK")
</pallas_src>

<mosaic_0001>
module attributes {stable_mosaic.version = 11 : i64} {
  func.func @_probe_kernel(%arg0: i32, %arg1: i32, %arg2: memref<8x32xf32, #tpu.memory_space<vmem>>, %arg3: memref<32x64xf32, #tpu.memory_space<vmem>>, %arg4: memref<1x64xf32, #tpu.memory_space<vmem>>, %arg5: memref<1x64xf32, #tpu.memory_space<vmem>>, %arg6: memref<1xf32, #tpu.memory_space<smem>>, %arg7: memref<1x8xf32, #tpu.memory_space<vmem>>, %arg8: memref<8x64xf32, #tpu.memory_space<vmem>>) attributes {dimension_semantics = [#tpu.dimension_semantics<parallel>, #tpu.dimension_semantics<arbitrary>], iteration_bounds = array<i64: 1, 1>, scalar_prefetch = 0 : i64, scratch_operands = 1 : i64, tpu.core_type = #tpu.core_type<tc>, window_params = [{transform_indices = @transform_0, window_bounds = array<i64: 8, 32>}, {transform_indices = @transform_1, window_bounds = array<i64: 32, 64>}, {pipeline_mode = #tpu.pipeline_mode<synchronous>, transform_indices = @transform_2, window_bounds = array<i64: 1, 64>}, {pipeline_mode = #tpu.pipeline_mode<synchronous>, transform_indices = @transform_3, window_bounds = array<i64: 1, 64>}, {transform_indices = @transform_4, window_bounds = array<i64: 1>}, {transform_indices = @transform_5, window_bounds = array<i64: 1, 8>}]} {
    %c0_i32 = arith.constant 0 : i32
    %0 = arith.cmpi eq, %arg1, %c0_i32 : i32
    %1 = arith.extui %0 : i1 to i32
    %c0_i32_0 = arith.constant 0 : i32
    %2 = arith.cmpi ne, %1, %c0_i32_0 : i32
    scf.if %2 {
      %cst_10 = arith.constant 0.000000e+00 : f32
      %12 = vector.broadcast %cst_10 : f32 to vector<8x64xf32>
      %c0_11 = arith.constant 0 : index
      %c0_12 = arith.constant 0 : index
      %13 = vector.load %arg8[%c0_11, %c0_12] : memref<8x64xf32, #tpu.memory_space<vmem>>, vector<8x64xf32>
      tpu.vector_store %arg8[%c0_11, %c0_12], %12 {strides = array<i32>} : memref<8x64xf32, #tpu.memory_space<vmem>>, vector<8x64xf32>,
    } else {
    }
    %c0 = arith.constant 0 : index
    %c0_1 = arith.constant 0 : index
    %3 = vector.load %arg8[%c0, %c0_1] : memref<8x64xf32, #tpu.memory_space<vmem>>, vector<8x64xf32>
    %c0_2 = arith.constant 0 : index
    %c0_3 = arith.constant 0 : index
    %4 = vector.load %arg2[%c0_2, %c0_3] : memref<8x32xf32, #tpu.memory_space<vmem>>, vector<8x32xf32>
    %c0_4 = arith.constant 0 : index
    %c0_5 = arith.constant 0 : index
    %5 = vector.load %arg3[%c0_4, %c0_5] : memref<32x64xf32, #tpu.memory_space<vmem>>, vector<32x64xf32>
    %cst = arith.constant dense<0.000000e+00> : vector<8x64xf32>
    %6 = tpu.matmul %4, %5, %cst {dimension_numbers = #tpu.dot_dimension_numbers<[1], [0], [0], [1], [0, 0, 1, 1], [], []>} : vector<8x32xf32>, vector<32x64xf32>, vector<8x64xf32> -> vector<8x64xf32>
    %7 = arith.addf %3, %6 : vector<8x64xf32>
    %c0_6 = arith.constant 0 : index
    %c0_7 = arith.constant 0 : index
    %8 = vector.load %arg8[%c0_6, %c0_7] : memref<8x64xf32, #tpu.memory_space<vmem>>, vector<8x64xf32>
    tpu.vector_store %arg8[%c0_6, %c0_7], %7 {strides = array<i32>} : memref<8x64xf32, #tpu.memory_space<vmem>>, vector<8x64xf32>,
    %c0_i32_8 = arith.constant 0 : i32
    %9 = arith.cmpi eq, %arg1, %c0_i32_8 : i32
    %10 = arith.extui %9 : i1 to i32
    %c0_i32_9 = arith.constant 0 : i32
    %11 = arith.cmpi ne, %10, %c0_i32_9 : i32
    scf.if %11 {
      %c0_10 = arith.constant 0 : index
      %c0_11 = arith.constant 0 : index
      %12 = vector.load %arg8[%c0_10, %c0_11] : memref<8x64xf32, #tpu.memory_space<vmem>>, vector<8x64xf32>
      %c0_12 = arith.constant 0 : index
      %c0_13 = arith.constant 0 : index
      %13 = vector.load %arg4[%c0_12, %c0_13] : memref<1x64xf32, #tpu.memory_space<vmem>>, vector<1x64xf32>
      %14 = vector.broadcast %13 : vector<1x64xf32> to vector<8x64xf32>
      %15 = arith.addf %12, %14 : vector<8x64xf32>
      %cst_14 = arith.constant 0.000000e+00 : f32
      %16 = vector.broadcast %cst_14 : f32 to vector<8x64xf32>
      %17 = arith.maximumf %15, %16 : vector<8x64xf32>
      %c0_15 = arith.constant 0 : index
      %c0_16 = arith.constant 0 : index
      %18 = vector.load %arg5[%c0_15, %c0_16] : memref<1x64xf32, #tpu.memory_space<vmem>>, vector<1x64xf32>
      %cst_17 = arith.constant dense<0.000000e+00> : vector<1x8xf32>
      %19 = tpu.matmul %18, %17, %cst_17 {dimension_numbers = #tpu.dot_dimension_numbers<[1], [1], [0], [0], [0, 0, 1, 0], [], []>} : vector<1x64xf32>, vector<8x64xf32>, vector<1x8xf32> -> vector<1x8xf32>
      %c0_18 = arith.constant 0 : index
      %20 = memref.load %arg6[%c0_18] : memref<1xf32, #tpu.memory_space<smem>>
      %21 = vector.broadcast %20 : f32 to vector<1x8xf32>
      %22 = arith.addf %19, %21 : vector<1x8xf32>
      %23 = arith.negf %22 : vector<1x8xf32>
      %24 = math.exp %23 : vector<1x8xf32>
      %cst_19 = arith.constant 1.000000e+00 : f32
      %25 = vector.broadcast %cst_19 : f32 to vector<1x8xf32>
      %26 = arith.addf %25, %24 : vector<1x8xf32>
      %27 = arith.divf %25, %26 : vector<1x8xf32>
      %c0_20 = arith.constant 0 : index
      %c0_21 = arith.constant 0 : index
      %28 = vector.load %arg7[%c0_20, %c0_21] : memref<1x8xf32, #tpu.memory_space<vmem>>, vector<1x8xf32>
      tpu.vector_store %arg7[%c0_20, %c0_21], %27 {strides = array<i32>} : memref<1x8xf32, #tpu.memory_space<vmem>>, vector<1x8xf32>,
    } else {
    }
    return
  }
  func.func @transform_0(%arg0: i32, %arg1: i32) -> (i32, i32) {
    %c0_i32 = arith.constant 0 : i32
    return %arg0, %arg1 : i32, i32
  }
  func.func @transform_1(%arg0: i32, %arg1: i32) -> (i32, i32) {
    %c0_i32 = arith.constant 0 : i32
    %c0_i32_0 = arith.constant 0 : i32
    return %arg1, %c0_i32 : i32, i32
  }
  func.func @transform_2(%arg0: i32, %arg1: i32) -> (i32, i32) {
    %c0_i32 = arith.constant 0 : i32
    %c0_i32_0 = arith.constant 0 : i32
    %c0_i32_1 = arith.constant 0 : i32
    return %c0_i32, %c0_i32_0 : i32, i32
  }
  func.func @transform_3(%arg0: i32, %arg1: i32) -> (i32, i32) {
    %c0_i32 = arith.constant 0 : i32
    %c0_i32_0 = arith.constant 0 : i32
    %c0_i32_1 = arith.constant 0 : i32
    return %c0_i32, %c0_i32_0 : i32, i32
  }
  func.func @transform_4(%arg0: i32, %arg1: i32) -> i32 {
    %c0_i32 = arith.constant 0 : i32
    %c0_i32_0 = arith.constant 0 : i32
    return %c0_i32 : i32
  }
  func.func @transform_5(%arg0: i32, %arg1: i32) -> (i32, i32) {
    %c0_i32 = arith.constant 0 : i32
    %c0_i32_0 = arith.constant 0 : i32
    return %c0_i32, %arg0 : i32, i32
  }
}

</mosaic_0001>

<llo_original>
// kernel: tpu_custom_call.1
$region0: #{tpu_custom_call.1}
  #allocation0 [shape = 'u32[]', space=smem, size = 0x4, offset = 0x4, fixed_abs, tag = 'smem constant byte address 0x4 - core index']
  #allocation1 [shape = 'u32[144,128]{1,0:T(1,128)}', space=vmem, size = 0x12000, scoped, tag = 'internal scratch']
  #allocation2 [shape = 'f32[8,64]{1,0:T(8,128)}', space=vmem, size = 0x1000, scoped, tag = 'scratch operand']
  #allocation3 [shape = 'f32[1]{0:T(128)S(6)}', space=smem, size = 0x200, scoped, tag = 'scoped memory for tpu_custom_call.1']
  %s0 = inlined_call_operand.hbm [shape: f32[8,32], index: 0, kind: input, shape index: {}]
  %s1 = inlined_call_operand.hbm [shape: f32[32,64], index: 1, kind: input, shape index: {}]
  %s2 = inlined_call_operand.vmem [shape: f32[1,64], index: 2, kind: input, shape index: {}]
  %s3 = inlined_call_operand.vmem [shape: f32[1,64], index: 3, kind: input, shape index: {}]
  %s4 = inlined_call_operand.<no memory space> [shape: f32[1], index: 4, kind: input, shape index: {}]
  %s5 = inlined_call_operand.hbm [shape: f32[1,8], index: 5, kind: output, shape index: {}]
  %s6 = sld [smem:[#allocation0]]
  $region46: #{tpu_custom_call.1} parent=0
    _
  %s8 = ssub.s32 1, %s6
  %s9 = scalar_select 0, %s8, %s6
  %10 = sst [smem:[#allocation3]] %s4
  $region1: #{tpu_custom_call.1} parent=0
    #allocation4 [shape = 'u8[4096]{0}', space=vmem, size = 0x1000, scoped, tag = 'input window, operand 0, single buffered']
    #allocation5 [shape = 's32[1]{0}', space=sflag, size = 0x4, scoped, tag = 'scoped memory for tpu_custom_call.1']
    #allocation6 [shape = 's32[1]{0}', space=sflag, size = 0x4, scoped, tag = 'scoped memory for tpu_custom_call.1']
    #allocation7 [shape = 'u8[16384]{0}', space=vmem, size = 0x4000, scoped, tag = 'input window, operand 1, single buffered']
    #allocation8 [shape = 's32[1]{0}', space=sflag, size = 0x4, scoped, tag = 'scoped memory for tpu_custom_call.1']
    #allocation9 [shape = 'u8[512]{0}', space=vmem, size = 0x400, scoped, tag = 'output window, operand 0, single buffered']
    %11 = vsyncpa [#allocation5], 0
    %12 = vsyncpa [#allocation8], 0
    %13 = vsyncpa [#allocation6], 0
    // Predicated region
    $region2: #{tpu_custom_call.1} parent=1 // pred_check
      _
    $region3: #{tpu_custom_call.1} parent=1 // pred_check_branch
      %15 = sbr.rel (0) target = $region5
    $region4: #{tpu_custom_call.1} parent=1 // pred_region
      %s17 = ssub.s32 128, 128
      %18 = vsyncadd [#allocation5], %s17
      %s20 = sshll.u32 [#allocation4], 4
      %s21 = int_to_ptr.vmem [resolvable:$true] %s20
      %23 = dma.hbm_to_vmem [thread:$0]  %s0, 128, %s21, [#allocation5]
    $region5: #{tpu_custom_call.1} parent=1 // pred_fallthru
      _
    // Predicated region
    $region6: #{tpu_custom_call.1} parent=1 // pred_check
      _
    $region7: #{tpu_custom_call.1} parent=1 // pred_check_branch
      %25 = sbr.rel (0) target = $region9
    $region8: #{tpu_custom_call.1} parent=1 // pred_region
      %s27 = ssub.s32 512, 512
      %28 = vsyncadd [#allocation8], %s27
      %s29 = sshll.u32 [#allocation7], 4
      %s30 = int_to_ptr.vmem [resolvable:$true] %s29
      %35 = dma.hbm_to_vmem [thread:$0]  %s1, 512, %s30, [#allocation8], 128, 128, 8
    $region9: #{tpu_custom_call.1} parent=1 // pred_fallthru
      _
    // Predicated region
    $region10: #{tpu_custom_call.1} parent=1 // pred_check
      _
    $region11: #{tpu_custom_call.1} parent=1 // pred_check_branch
      %37 = sbr.rel (0) target = $region13
    $region12: #{tpu_custom_call.1} parent=1 // pred_region
      _
    $region13: #{tpu_custom_call.1} parent=1 // pred_fallthru
      _
    // Predicated region
    $region14: #{tpu_custom_call.1} parent=1 // pred_check
      _
    $region15: #{tpu_custom_call.1} parent=1 // pred_check_branch
      %39 = sbr.rel (0) target = $region17
    $region16: #{tpu_custom_call.1} parent=1 // pred_region
      _
    $region17: #{tpu_custom_call.1} parent=1 // pred_fallthru
      _
    // Predicated region
    $region18: #{tpu_custom_call.1} parent=1 // pred_check
      _
    $region19: #{tpu_custom_call.1} parent=1 // pred_check_branch
      %41 = sbr.rel (0) target = $region21
    $region20: #{tpu_custom_call.1} parent=1 // pred_region
      _
    $region21: #{tpu_custom_call.1} parent=1 // pred_fallthru
      _
    // Predicated region
    $region22: #{tpu_custom_call.1} parent=1 // pred_check
      _
    $region23: #{tpu_custom_call.1} parent=1 // pred_check_branch
      %43 = sbr.rel (0) target = $region25
    $region24: #{tpu_custom_call.1} parent=1 // pred_region
      %44 = dma.done [#allocation5], 128
    $region25: #{tpu_custom_call.1} parent=1 // pred_fallthru
      _
    // Predicated region
    $region26: #{tpu_custom_call.1} parent=1 // pred_check
      _
    $region27: #{tpu_custom_call.1} parent=1 // pred_check_branch
      %46 = sbr.rel (0) target = $region29
    $region28: #{tpu_custom_call.1} parent=1 // pred_region
      %47 = dma.done [#allocation8], 512
    $region29: #{tpu_custom_call.1} parent=1 // pred_fallthru
      _
    %p48 = scmp.eq.s32.totalorder 0, 0
    // Predicated region
    $region30: #{tpu_custom_call.1} parent=1 // pred_check
      %p49 = pneg %p48
    $region31: #{tpu_custom_call.1} parent=1 // pred_check_branch
      %51 = sbr.rel (%p49) target = $region33
    $region32: #{tpu_custom_call.1} parent=1 // pred_region
      %vm52 = vcmask 523264
      %53 = vst.msk [vmem:[#allocation2] sm:$0xff] %vm52, 0.0
    $region33: #{tpu_custom_call.1} parent=1 // pred_fallthru
      _
    %v54 = vld [vmem:[#allocation2] sm:$0xff]
    %v55 = vld [vmem:[#allocation4] sm:$0xff]
    %v56 = vld [vmem:[#allocation7] sm:$0xff]
    %v57 = vld [vmem:[#allocation7 + $0x8] sm:$0xff]
    %v58 = vld [vmem:[#allocation7 + $0x10] sm:$0xff]
    %v59 = vld [vmem:[#allocation7 + $0x18] sm:$0xff]
    %vm60 = vcmask 261120
    %v62 = vsel %vm60, %v55, 0
    %64 = vmatprep.subr.mxu0 0.0
    %65 = vmatpush1.msra.mxu0 %v56
    %66 = vmatprep.subr.mxu0 0.0
    %67 = vmatpush1.msra.mxu0 %v57
    %68 = vmatprep.subr.mxu0 0.0
    %69 = vmatpush1.msra.mxu0 %v58
    %70 = vmatprep.subr.mxu0 0.0
    %71 = vmatpush1.msra.mxu0 %v59
    %72 = vmatprep.subr.mxu0 0.0
    %73 = vmatpush1.msra.mxu0 0.0
    %74 = vmatprep.subr.mxu0 0.0
    %75 = vmatpush1.msra.mxu0 0.0
    %76 = vmatprep.subr.mxu0 0.0
    %77 = vmatpush1.msra.mxu0 0.0
    %78 = vmatprep.subr.mxu0 0.0
    %79 = vmatpush1.msra.mxu0 0.0
    %80 = vmatprep.subr.mxu0 0.0
    %81 = vmatpush1.msra.mxu0 0.0
    %82 = vmatprep.subr.mxu0 0.0
    %83 = vmatpush1.msra.mxu0 0.0
    %84 = vmatprep.subr.mxu0 0.0
    %85 = vmatpush1.msra.mxu0 0.0
    %86 = vmatprep.subr.mxu0 0.0
    %87 = vmatpush1.msra.mxu0 0.0
    %88 = vmatprep.subr.mxu0 0.0
    %89 = vmatpush1.msra.mxu0 0.0
    %90 = vmatprep.subr.mxu0 0.0
    %91 = vmatpush1.msra.mxu0 0.0
    %92 = vmatprep.subr.mxu0 0.0
    %93 = vmatpush1.msra.mxu0 0.0
    %94 = vmatprep.subr.mxu0 0.0
    %95 = vmatpush1.msra.mxu0 0.0
    %96 = vmatprep.subr.mxu0 0.0
    %97 = vmatpush1.msra.mxu0 0.0
    %98 = vmatprep.subr.mxu0 0.0
    %99 = vmatpush1.msra.mxu0 0.0
    %100 = vmatprep.subr.mxu0 0.0
    %101 = vmatpush1.msra.mxu0 0.0
    %102 = vmatprep.subr.mxu0 0.0
    %103 = vmatpush1.msra.mxu0 0.0
    %104 = vmatprep.subr.mxu0 0.0
    %105 = vmatpush1.msra.mxu0 0.0
    %106 = vmatprep.subr.mxu0 0.0
    %107 = vmatpush1.msra.mxu0 0.0
    %108 = vmatprep.subr.mxu0 0.0
    %109 = vmatpush1.msra.mxu0 0.0
    %110 = vmatprep.subr.mxu0 0.0
    %111 = vmatpush1.msra.mxu0 0.0
    %112 = vmatprep.subr.mxu0 0.0
    %113 = vmatpush1.msra.mxu0 0.0
    %114 = vmatprep.subr.mxu0 0.0
    %115 = vmatpush1.msra.mxu0 0.0
    %116 = vmatprep.subr.mxu0 0.0
    %117 = vmatpush1.msra.mxu0 0.0
    %118 = vmatprep.subr.mxu0 0.0
    %119 = vmatpush1.msra.mxu0 0.0
    %120 = vmatprep.subr.mxu0 0.0
    %121 = vmatpush1.msra.mxu0 0.0
    %122 = vmatprep.subr.mxu0 0.0
    %123 = vmatpush1.msra.mxu0 0.0
    %124 = vmatprep.subr.mxu0 0.0
    %125 = vmatpush1.msra.mxu0 0.0
    %126 = vmatprep.subr.mxu0 0.0
    %127 = vmatpush1.msra.mxu0 0.0
    %128 = vmatprep.mubr.f32.mxu0 0.0
    %129 = vmatmul.mubr.f32.gmra.mrb[0].mxu0 %v62
    %v130 = vpop.f32.mrb[0].mxu0
    %v131 = vadd.f32 0.0, %v130
    %v132 = vpop.f32.mrb[0].mxu0
    %133 = vdwg.mxu0
    %v134 = vadd.f32 %v54, %v131
    %vm135 = vcmask 523264
    %136 = vst.msk [vmem:[#allocation2] sm:$0xff] %vm135, %v134
    // Predicated region
    $region34: #{tpu_custom_call.1} parent=1 // pred_check
      %p137 = pneg %p48
    $region35: #{tpu_custom_call.1} parent=1 // pred_check_branch
      %139 = sbr.rel (%p137) target = $region37
    $region36: #{tpu_custom_call.1} parent=1 // pred_region
      %v140 = vld [vmem:[#allocation2] sm:$0xff]
      %v141 = vld [vmem:[%s2] sm:$0x1]
      %v143 = vlaneseq
      %v144 = vshrl.u32 %v143, 7
      %v145 = vsub.s32 0, %v144
      %v146 = vrot.slane %v141, %v145
      %v148 = vadd.f32 %v140, %v146
      %v149 = vmax.f32 %v148, 0.0
      %v150 = vld [vmem:[%s3] sm:$0x1]
      %s151 = sld [smem:[#allocation3]]
      %v152 = vstv %s151
      %v154 = vsel %vm135, %v150, 0
      %v157 = vsel %vm135, %v149, 0
      %159 = vmatprep.subr.mxu0 0.0
      %160 = vmatpush1.xpose.msra.mxu0 %v157
      %161 = vmatprep.subr.mxu0 0.0
      %162 = vmatpush1.xpose.msra.mxu0 0.0
      %163 = vmatprep.subr.mxu0 0.0
      %164 = vmatpush1.xpose.msra.mxu0 0.0
      %165 = vmatprep.subr.mxu0 0.0
      %166 = vmatpush1.xpose.msra.mxu0 0.0
      %167 = vmatprep.subr.mxu0 0.0
      %168 = vmatpush1.xpose.msra.mxu0 0.0
      %169 = vmatprep.subr.mxu0 0.0
      %170 = vmatpush1.xpose.msra.mxu0 0.0
      %171 = vmatprep.subr.mxu0 0.0
      %172 = vmatpush1.xpose.msra.mxu0 0.0
      %173 = vmatprep.subr.mxu0 0.0
      %174 = vmatpush1.xpose.msra.mxu0 0.0
      %175 = vmatprep.subr.mxu0 0.0
      %176 = vmatpush1.xpose.msra.mxu0 0.0
      %177 = vmatprep.subr.mxu0 0.0
      %178 = vmatpush1.xpose.msra.mxu0 0.0
      %179 = vmatprep.subr.mxu0 0.0
      %180 = vmatpush1.xpose.msra.mxu0 0.0
      %181 = vmatprep.subr.mxu0 0.0
      %182 = vmatpush1.xpose.msra.mxu0 0.0
      %183 = vmatprep.subr.mxu0 0.0
      %184 = vmatpush1.xpose.msra.mxu0 0.0
      %185 = vmatprep.subr.mxu0 0.0
      %186 = vmatpush1.xpose.msra.mxu0 0.0
      %187 = vmatprep.subr.mxu0 0.0
      %188 = vmatpush1.xpose.msra.mxu0 0.0
      %189 = vmatprep.subr.mxu0 0.0
      %190 = vmatpush1.xpose.msra.mxu0 0.0
      %191 = vmatprep.subr.mxu0 0.0
      %192 = vmatpush1.xpose.msra.mxu0 0.0
      %193 = vmatprep.subr.mxu0 0.0
      %194 = vmatpush1.xpose.msra.mxu0 0.0
      %195 = vmatprep.subr.mxu0 0.0
      %196 = vmatpush1.xpose.msra.mxu0 0.0
      %197 = vmatprep.subr.mxu0 0.0
      %198 = vmatpush1.xpose.msra.mxu0 0.0
      %199 = vmatprep.subr.mxu0 0.0
      %200 = vmatpush1.xpose.msra.mxu0 0.0
      %201 = vmatprep.subr.mxu0 0.0
      %202 = vmatpush1.xpose.msra.mxu0 0.0
      %203 = vmatprep.subr.mxu0 0.0
      %204 = vmatpush1.xpose.msra.mxu0 0.0
      %205 = vmatprep.subr.mxu0 0.0
      %206 = vmatpush1.xpose.msra.mxu0 0.0
      %207 = vmatprep.subr.mxu0 0.0
      %208 = vmatpush1.xpose.msra.mxu0 0.0
      %209 = vmatprep.subr.mxu0 0.0
      %210 = vmatpush1.xpose.msra.mxu0 0.0
      %211 = vmatprep.subr.mxu0 0.0
      %212 = vmatpush1.xpose.msra.mxu0 0.0
      %213 = vmatprep.subr.mxu0 0.0
      %214 = vmatpush1.xpose.msra.mxu0 0.0
      %215 = vmatprep.subr.mxu0 0.0
      %216 = vmatpush1.xpose.msra.mxu0 0.0
      %217 = vmatprep.subr.mxu0 0.0
      %218 = vmatpush1.xpose.msra.mxu0 0.0
      %219 = vmatprep.subr.mxu0 0.0
      %220 = vmatpush1.xpose.msra.mxu0 0.0
      %221 = vmatprep.subr.mxu0 0.0
      %222 = vmatpush1.xpose.msra.mxu0 0.0
      %223 = vmatprep.mubr.f32.mxu0 0.0
      %224 = vmatmul.mubr.f32.gmra.mrb[0].mxu0 %v154
      %v225 = vpop.f32.mrb[0].mxu0
      %v226 = vadd.f32 %v152, %v225
      %v227 = vpop.f32.mrb[0].mxu0
      %228 = vdwg.mxu0
      %v229 = vxor.u32 %v226, 2147483648
      %v230 = vmul.f32 %v229, 1.442695
      %v231 = vpow.pop %v230
      %v232 = vadd.f32 %v231, 1.0
      %v233 = vrcp.pop %v232
      %v234 = vmul.f32 1.0, %v233
      %vm235 = vcmask 57344
      %236 = vst.msk [vmem:[#allocation9] sm:$0x1] %vm235, %v234
    $region37: #{tpu_custom_call.1} parent=1 // pred_fallthru
      _
    // Predicated region
    $region38: #{tpu_custom_call.1} parent=1 // pred_check
      _
    $region39: #{tpu_custom_call.1} parent=1 // pred_check_branch
      %238 = sbr.rel (0) target = $region41
    $region40: #{tpu_custom_call.1} parent=1 // pred_region
      %s240 = ssub.s32 16, 16
      %241 = vsyncadd [#allocation6], %s240
      %s243 = sshll.u32 [#allocation9], 4
      %s244 = int_to_ptr.vmem [resolvable:$true] %s243
      %246 = dma.vmem_to_hbm [thread:$0]  %s244, 16, %s5, [#allocation6]
    $region41: #{tpu_custom_call.1} parent=1 // pred_fallthru
      _
    // Predicated region
    $region42: #{tpu_custom_call.1} parent=1 // pred_check
      _
    $region43: #{tpu_custom_call.1} parent=1 // pred_check_branch
      %248 = sbr.rel (0) target = $region45
    $region44: #{tpu_custom_call.1} parent=1 // pred_region
      %249 = dma.done [#allocation6], 16
    $region45: #{tpu_custom_call.1} parent=1 // pred_fallthru
      _
    %250 = vsyncpa [#allocation5], 1
    %251 = vsyncpa [#allocation8], 1
    %252 = vsyncpa [#allocation6], 1

</llo_original>
